<compile_context>
chip_gen: v7x
topology: tpu7x:2x2x1
jax: 0.10.0
libtpu: 0.0.40
codegen_flags: <defaults>
</compile_context>

<pallas_src>
import math

import jax
import jax.numpy as jnp
from jax.experimental import pallas as pl
from jax.experimental.pallas import tpu as pltpu


# ----------------------------------------------------------------------------
# Kernels
# ----------------------------------------------------------------------------
def _pe_add_kernel(x_ref, pe_ref, o_ref):
    # x_ref: (Bt, TS, D), pe_ref: (TS, D) broadcast over the folded batch dim.
    pe = pe_ref[...].astype(x_ref.dtype)          # stay in x's dtype (bf16-friendly)
    o_ref[...] = (x_ref[...] + pe[None, :, :]).astype(o_ref.dtype)


def _pe_add_dropout_kernel(x_ref, pe_ref, m_ref, o_ref):
    # m_ref holds the pre-scaled inverted-dropout mask: values in {0, 1/(1-p)},
    # already in x's dtype -> one VPU multiply, no int->float conversion work.
    pe = pe_ref[...].astype(x_ref.dtype)
    y = x_ref[...] + pe[None, :, :]
    o_ref[...] = (y * m_ref[...]).astype(o_ref.dtype)


# ----------------------------------------------------------------------------
# Sinusoidal table (identical to the PyTorch __init__)
# ----------------------------------------------------------------------------
def make_pe_table(d_model, max_len=5000, dtype=jnp.float32):
    position = jnp.arange(0, max_len, dtype=jnp.float32)[:, None]              # (max_len, 1)
    div_term = jnp.exp(jnp.arange(0, d_model, 2, dtype=jnp.float32)
                       * (-(math.log(10000.0) / d_model)))                     # (d_model/2,)
    pe = jnp.zeros((max_len, d_model), dtype=jnp.float32)
    pe = pe.at[:, 0::2].set(jnp.sin(position * div_term))
    pe = pe.at[:, 1::2].set(jnp.cos(position * div_term))
    return pe.astype(dtype)


# ----------------------------------------------------------------------------
# Tiling heuristics
# ----------------------------------------------------------------------------
def _round_up(n, m):
    return ((n + m - 1) // m) * m


def _choose_tiles(B, S, D, itemsize, target_bytes=1 << 20):
    """Pick (batch_tile, seq_tile) so one block is ~target_bytes and seq_tile % 8 == 0."""
    rows = max(8, target_bytes // max(1, D * itemsize))
    ts = min(_round_up(S, 8), _round_up(rows, 8))
    block_bytes = ts * D * itemsize
    bt = max(1, min(B, target_bytes // max(1, block_bytes)))
    return bt, ts


# ----------------------------------------------------------------------------
# Wrapper
# ----------------------------------------------------------------------------
def positional_encoding(x, pe_table, *, dropout_p=0.0, training=True, rng_key=None):
    """x: (B, S, D); pe_table: (max_len, D). Returns dropout(x + pe[:S])."""
    B, S, D = x.shape
    max_len, d_pe = pe_table.shape
    assert d_pe == D, "pe_table d_model mismatch"
    assert S <= max_len, "sequence length exceeds positional table"

    bt, ts = _choose_tiles(B, S, D, jnp.dtype(x.dtype).itemsize)
    grid = (pl.cdiv(B, bt), pl.cdiv(S, ts))

    x_spec = pl.BlockSpec((bt, ts, D), lambda b, s: (b, s, 0))
    pe_spec = pl.BlockSpec((ts, D), lambda b, s: (s, 0))   # rows taken straight from the full table
    out_spec = pl.BlockSpec((bt, ts, D), lambda b, s: (b, s, 0))

    use_dropout = (dropout_p > 0.0) and training
    if use_dropout:
        if rng_key is None:
            rng_key = jax.random.PRNGKey(0)
        keep = jax.random.bernoulli(rng_key, 1.0 - dropout_p, (B, S, D))
        mask = keep.astype(x.dtype) * jnp.asarray(1.0 / (1.0 - dropout_p), dtype=x.dtype)
        kernel = _pe_add_dropout_kernel
        in_specs = [x_spec, pe_spec, x_spec]
        operands = (x, pe_table, mask)
    else:
        kernel = _pe_add_kernel
        in_specs = [x_spec, pe_spec]
        operands = (x, pe_table)

    return pl.pallas_call(
        kernel,
        out_shape=jax.ShapeDtypeStruct((B, S, D), x.dtype),
        grid=grid,
        in_specs=in_specs,
        out_specs=out_spec,
        compiler_params=pltpu.CompilerParams(
            # both grid axes are fully independent -> let v7x shard across its 2 TCs
            dimension_semantics=("parallel", "parallel"),
            # explicit, generous-but-safe scoped limit; blocks are ~1 MiB so the
            # double-buffered footprint stays far below this on v5e/v6e/v7x.
            vmem_limit_bytes=32 * 1024 * 1024,
        ),
    )(*operands)


# ----------------------------------------------------------------------------
# Demo / correctness check
# ----------------------------------------------------------------------------
if __name__ == "__main__":
    B, S, D = 2, 8, 32          # batch, seq_len, d_model
    MAX_LEN = 64                # small max_len (module default is 5000)
    DROPOUT_P = 0.1

    key = jax.random.PRNGKey(0)
    kx, kdrop = jax.random.split(key)
    x = jax.random.normal(kx, (B, S, D), dtype=jnp.float32)

    pe_table = make_pe_table(D, max_len=MAX_LEN)
    ref = x + pe_table[None, :S, :]

    # 1) eval-mode semantics (dropout off): must equal x + pe
    out_eval = positional_encoding(x, pe_table, dropout_p=DROPOUT_P, training=False)
    out_eval = jax.block_until_ready(out_eval)
    assert out_eval.shape == (B, S, D)
    assert jnp.allclose(out_eval, ref, atol=1e-6), "eval-mode mismatch vs reference"

    # 2) train-mode semantics (inverted dropout, mask reproducible from the key)
    out_train = positional_encoding(x, pe_table, dropout_p=DROPOUT_P, training=True,
                                    rng_key=kdrop)
    out_train = jax.block_until_ready(out_train)
    assert out_train.shape == (B, S, D)
    keep = jax.random.bernoulli(kdrop, 1.0 - DROPOUT_P, (B, S, D))
    expected = ref * (keep.astype(x.dtype) * jnp.float32(1.0 / (1.0 - DROPOUT_P)))
    assert jnp.allclose(out_train, expected, atol=1e-5), "train-mode mismatch vs reference"

    print("KERNEL_OK")
</pallas_src>

<mosaic_0001>
module attributes {stable_mosaic.version = 11 : i64} {
  func.func @_pe_add_kernel(%arg0: i32, %arg1: i32, %arg2: memref<2x8x32xf32, #tpu.memory_space<vmem>>, %arg3: memref<8x32xf32, #tpu.memory_space<vmem>>, %arg4: memref<2x8x32xf32, #tpu.memory_space<vmem>>) attributes {dimension_semantics = [#tpu.dimension_semantics<parallel>, #tpu.dimension_semantics<parallel>], iteration_bounds = array<i64: 1, 1>, scalar_prefetch = 0 : i64, scratch_operands = 0 : i64, tpu.core_type = #tpu.core_type<tc>, window_params = [{transform_indices = @transform_0, window_bounds = array<i64: 2, 8, 32>}, {transform_indices = @transform_1, window_bounds = array<i64: 8, 32>}, {transform_indices = @transform_2, window_bounds = array<i64: 2, 8, 32>}]} {
    %c0 = arith.constant 0 : index
    %c0_0 = arith.constant 0 : index
    %0 = vector.load %arg3[%c0, %c0_0] : memref<8x32xf32, #tpu.memory_space<vmem>>, vector<8x32xf32>
    %c0_1 = arith.constant 0 : index
    %c0_2 = arith.constant 0 : index
    %c0_3 = arith.constant 0 : index
    %1 = vector.load %arg2[%c0_1, %c0_2, %c0_3] : memref<2x8x32xf32, #tpu.memory_space<vmem>>, vector<2x8x32xf32>
    %2 = vector.shape_cast %0 : vector<8x32xf32> to vector<1x8x32xf32>
    %3 = vector.broadcast %2 : vector<1x8x32xf32> to vector<2x8x32xf32>
    %4 = arith.addf %1, %3 : vector<2x8x32xf32>
    %c0_4 = arith.constant 0 : index
    %c0_5 = arith.constant 0 : index
    %c0_6 = arith.constant 0 : index
    %5 = vector.load %arg4[%c0_4, %c0_5, %c0_6] : memref<2x8x32xf32, #tpu.memory_space<vmem>>, vector<2x8x32xf32>
    tpu.vector_store %arg4[%c0_4, %c0_5, %c0_6], %4 {strides = array<i32>} : memref<2x8x32xf32, #tpu.memory_space<vmem>>, vector<2x8x32xf32>,
    return
  }
  func.func @transform_0(%arg0: i32, %arg1: i32) -> (i32, i32, i32) {
    %c0_i32 = arith.constant 0 : i32
    %c0_i32_0 = arith.constant 0 : i32
    return %arg0, %arg1, %c0_i32 : i32, i32, i32
  }
  func.func @transform_1(%arg0: i32, %arg1: i32) -> (i32, i32) {
    %c0_i32 = arith.constant 0 : i32
    %c0_i32_0 = arith.constant 0 : i32
    return %arg1, %c0_i32 : i32, i32
  }
  func.func @transform_2(%arg0: i32, %arg1: i32) -> (i32, i32, i32) {
    %c0_i32 = arith.constant 0 : i32
    %c0_i32_0 = arith.constant 0 : i32
    return %arg0, %arg1, %c0_i32 : i32, i32, i32
  }
}

</mosaic_0001>

<llo_original>
// kernel: tpu_custom_call.1
$region0: #{tpu_custom_call.1}
  #allocation0 [shape = 'u32[]', space=smem, size = 0x4, offset = 0x4, fixed_abs, tag = 'smem constant byte address 0x4 - core index']
  #allocation1 [shape = 'u32[144,128]{1,0:T(1,128)}', space=vmem, size = 0x12000, scoped, tag = 'internal scratch']
  %s0 = inlined_call_operand.vmem [shape: f32[2,8,32], index: 0, kind: input, shape index: {}]
  %s1 = inlined_call_operand.vmem [shape: f32[64,32], index: 1, kind: input, shape index: {}]
  %s2 = inlined_call_operand.hbm [shape: f32[2,8,32], index: 2, kind: output, shape index: {}]
  %s3 = sld [smem:[#allocation0]]
  $region18: #{tpu_custom_call.1} parent=0
    _
  %s5 = ssub.s32 1, %s3
  %s6 = scalar_select 0, %s5, %s3
  $region1: #{tpu_custom_call.1} parent=0
    #allocation2 [shape = 'u8[8192]{0}', space=vmem, size = 0x2000, scoped, tag = 'output window, operand 0, single buffered']
    #allocation3 [shape = 's32[1]{0}', space=sflag, size = 0x4, scoped, tag = 'scoped memory for tpu_custom_call.1']
    %7 = vsyncpa [#allocation3], 0
    // Predicated region
    $region2: #{tpu_custom_call.1} parent=1 // pred_check
      _
    $region3: #{tpu_custom_call.1} parent=1 // pred_check_branch
      %9 = sbr.rel (0) target = $region5
    $region4: #{tpu_custom_call.1} parent=1 // pred_region
      _
    $region5: #{tpu_custom_call.1} parent=1 // pred_fallthru
      _
    // Predicated region
    $region6: #{tpu_custom_call.1} parent=1 // pred_check
      _
    $region7: #{tpu_custom_call.1} parent=1 // pred_check_branch
      %11 = sbr.rel (0) target = $region9
    $region8: #{tpu_custom_call.1} parent=1 // pred_region
      _
    $region9: #{tpu_custom_call.1} parent=1 // pred_fallthru
      _
    %v12 = vld [vmem:[%s1] sm:$0xff]
    %v13 = vld [vmem:[%s0] sm:$0xff]
    %v14 = vld [vmem:[%s0 + $0x8] sm:$0xff]
    %v15 = vadd.f32 %v13, %v12
    %v16 = vadd.f32 %v14, %v12
    %vm17 = vcmask 261120
    %18 = vst.msk [vmem:[#allocation2] sm:$0xff] %vm17, %v15
    %19 = vst.msk [vmem:[#allocation2 + $0x8] sm:$0xff] %vm17, %v16
    // Predicated region
    $region10: #{tpu_custom_call.1} parent=1 // pred_check
      _
    $region11: #{tpu_custom_call.1} parent=1 // pred_check_branch
      %21 = sbr.rel (0) target = $region13
    $region12: #{tpu_custom_call.1} parent=1 // pred_region
      %s23 = ssub.s32 256, 256
      %24 = vsyncadd [#allocation3], %s23
      %s25 = sshll.u32 [#allocation2], 4
      %s26 = int_to_ptr.vmem [resolvable:$true] %s25
      %31 = dma.vmem_to_hbm [thread:$0]  %s26, 256, %s2, [#allocation3], 128, 128, 8
    $region13: #{tpu_custom_call.1} parent=1 // pred_fallthru
      _
    // Predicated region
    $region14: #{tpu_custom_call.1} parent=1 // pred_check
      _
    $region15: #{tpu_custom_call.1} parent=1 // pred_check_branch
      %33 = sbr.rel (0) target = $region17
    $region16: #{tpu_custom_call.1} parent=1 // pred_region
      %34 = dma.done [#allocation3], 256
    $region17: #{tpu_custom_call.1} parent=1 // pred_fallthru
      _
    %35 = vsyncpa [#allocation3], 1

</llo_original>
